<compile_context>
chip_gen: v5e
topology: v5e:2x2
jax: 0.10.0
libtpu: 0.0.40
codegen_flags: <defaults>
</compile_context>

<pallas_src>
import functools

import jax
import jax.numpy as jnp
from jax.experimental import pallas as pl
from jax.experimental.pallas import tpu as pltpu

HIDDEN = 64     # fixed by the PyTorch module
LANE = 128      # TPU lane width


def _round_up(x, m):
    return (x + m - 1) // m * m


def _mlp_kernel(x_ref, w1_ref, b1_ref, w2_ref, b2_ref, w3_ref, b3_ref, o_ref):
    # Layer 1: relu(x @ W1 + b1) — bf16 MXU operands, f32 accumulate / VPU math.
    x = x_ref[...].astype(jnp.bfloat16)
    h = jnp.dot(x, w1_ref[...], preferred_element_type=jnp.float32)
    h = jnp.maximum(h + b1_ref[...], 0.0)
    # Layer 2: relu(h @ W2 + b2)
    h = jnp.dot(h.astype(jnp.bfloat16), w2_ref[...],
                preferred_element_type=jnp.float32)
    h = jnp.maximum(h + b2_ref[...], 0.0)
    # Output layer: h @ W3 + b3 (no activation); narrow (TM, output_size) store.
    out = jnp.dot(h.astype(jnp.bfloat16), w3_ref[...],
                  preferred_element_type=jnp.float32)
    o_ref[...] = (out + b3_ref[...]).astype(o_ref.dtype)


def prepare_params(params):
    """One-time prep: transpose (out,in)->(in,out), zero-pad the *hidden* dim
    to 128 lanes, keep the output dim narrow, cast weights to bf16 (biases f32).

    Padded hidden units have zero incoming weights and zero bias, so
    relu(0) == 0 and their zero outgoing rows contribute nothing: numerics are
    identical to the unpadded model."""
    (w1, b1), (w2, b2), (w3, b3) = params
    in_size = w1.shape[1]
    hidden = w1.shape[0]
    out_size = w3.shape[0]
    h_pad = _round_up(hidden, LANE)

    w1_t = jnp.zeros((in_size, h_pad), jnp.float32).at[:, :hidden].set(w1.T)
    b1_r = jnp.zeros((1, h_pad), jnp.float32).at[:, :hidden].set(b1[None, :])
    w2_t = jnp.zeros((h_pad, h_pad), jnp.float32).at[:hidden, :hidden].set(w2.T)
    b2_r = jnp.zeros((1, h_pad), jnp.float32).at[:, :hidden].set(b2[None, :])
    w3_t = jnp.zeros((h_pad, out_size), jnp.float32).at[:hidden, :].set(w3.T)
    b3_r = b3.reshape(1, out_size).astype(jnp.float32)

    return (w1_t.astype(jnp.bfloat16), b1_r,
            w2_t.astype(jnp.bfloat16), b2_r,
            w3_t.astype(jnp.bfloat16), b3_r)


def _choose_tm(B, in_size, out_size, tm_cap):
    """Batch-tile rows: a multiple of 8 (f32 sublanes), capped by tm_cap, a
    ~12 MiB double-buffered x/out VMEM budget, and ceil(B/2) so the grid has
    >=2 steps (both v7x TensorCores engage) whenever B allows it."""
    tm_cap = max(8, (int(tm_cap) // 8) * 8)          # robustness: force mult-of-8
    if B < 8:
        return B                                     # single full-array tile (legal)
    row_bytes = 2 * 4 * (in_size + out_size)         # double-buffered f32 rows
    tm_vmem = max(8, ((12 << 20) // row_bytes) // 8 * 8)
    half = max(8, _round_up(pl.cdiv(B, 2), 8))
    return min(tm_cap, tm_vmem, half, (B // 8) * 8)


@functools.partial(jax.jit, static_argnames=("tm",))
def mlp_forward(x, prepped, *, tm=4096):
    """Fused MLP forward. x: [B, input_size] (f32 or bf16); returns [B, output_size] f32."""
    w1_t, b1_r, w2_t, b2_r, w3_t, b3_r = prepped
    B, in_size = x.shape
    out_size = w3_t.shape[1]

    TM = _choose_tm(B, in_size, out_size, tm)
    grid = (pl.cdiv(B, TM),)   # ragged last tile: OOB reads are garbage in padded
                               # rows only; their OOB output writes are dropped.

    # Explicit VMEM budget: v5e's scoped default is 16 MiB, v7x has only 64 MiB
    # physical. Account for double-buffered x/out tiles + resident weights.
    weight_bytes = sum(int(a.size) * a.dtype.itemsize
                       for a in (w1_t, b1_r, w2_t, b2_r, w3_t, b3_r))
    need = (2 * TM * in_size * x.dtype.itemsize
            + 2 * TM * out_size * 4
            + 2 * weight_bytes
            + (2 << 20))                                    # slack
    vmem_limit = int(min(max(need, 32 << 20), 48 << 20))

    def const(a):
        return pl.BlockSpec(a.shape, lambda i: (0, 0))      # resident across grid

    return pl.pallas_call(
        _mlp_kernel,
        out_shape=jax.ShapeDtypeStruct((B, out_size), jnp.float32),
        grid=grid,
        in_specs=[
            pl.BlockSpec((TM, in_size), lambda i: (i, 0)),   # x: tiled over batch
            const(w1_t), const(b1_r),
            const(w2_t), const(b2_r),
            const(w3_t), const(b3_r),
        ],
        out_specs=pl.BlockSpec((TM, out_size), lambda i: (i, 0)),
        compiler_params=pltpu.CompilerParams(
            dimension_semantics=("parallel",),
            vmem_limit_bytes=vmem_limit),
    )(x, w1_t, b1_r, w2_t, b2_r, w3_t, b3_r)


def init_linear(key, in_features, out_features):
    """Deterministic init matching nn.Linear default (uniform +-1/sqrt(fan_in))."""
    kw, kb = jax.random.split(key)
    bound = 1.0 / jnp.sqrt(jnp.float32(in_features))
    w = jax.random.uniform(kw, (out_features, in_features), jnp.float32,
                           minval=-bound, maxval=bound)
    b = jax.random.uniform(kb, (out_features,), jnp.float32,
                           minval=-bound, maxval=bound)
    return w, b


def reference_forward_f32(x, params):
    (w1, b1), (w2, b2), (w3, b3) = params
    h = jnp.maximum(x @ w1.T + b1, 0.0)
    h = jnp.maximum(h @ w2.T + b2, 0.0)
    return h @ w3.T + b3


def reference_forward_bf16(x, params):
    """Mirrors the kernel's math: bf16 operands, f32 accumulation."""
    (w1, b1), (w2, b2), (w3, b3) = params
    bf = jnp.bfloat16
    h = jnp.dot(x.astype(bf), w1.T.astype(bf),
                preferred_element_type=jnp.float32) + b1
    h = jnp.maximum(h, 0.0)
    h = jnp.dot(h.astype(bf), w2.T.astype(bf),
                preferred_element_type=jnp.float32) + b2
    h = jnp.maximum(h, 0.0)
    return jnp.dot(h.astype(bf), w3.T.astype(bf),
                   preferred_element_type=jnp.float32) + b3


if __name__ == "__main__":
    key = jax.random.PRNGKey(0)
    k_x, k1, k2, k3 = jax.random.split(key, 4)

    batch = 8
    input_size = 32
    output_size = 10

    # norm=False default path (data_gen.norm not applied).
    # TODO(synk): data_gen.norm(x) path (norm=True) not implemented — data_gen is external.

    x = jax.random.normal(k_x, (batch, input_size), jnp.float32)
    params = (
        init_linear(k1, input_size, HIDDEN),
        init_linear(k2, HIDDEN, HIDDEN),
        init_linear(k3, HIDDEN, output_size),
    )

    prepped = prepare_params(params)          # one-time parameter prep (hoisted)
    y = mlp_forward(x, prepped)
    y = jax.block_until_ready(y)

    assert y.shape == (batch, output_size)
    y_bf = reference_forward_bf16(x, params)
    y_f32 = reference_forward_f32(x, params)
    assert jnp.allclose(y, y_bf, atol=1e-2, rtol=1e-2), "mismatch vs bf16-math reference"
    assert jnp.allclose(y, y_f32, atol=5e-2, rtol=5e-2), "mismatch vs f32 reference"

    print("KERNEL_OK")
</pallas_src>

<mosaic_0001>
module attributes {stable_mosaic.version = 11 : i64} {
  func.func @_mlp_kernel(%arg0: i32, %arg1: memref<8x32xf32, #tpu.memory_space<vmem>>, %arg2: memref<32x128xbf16, #tpu.memory_space<vmem>>, %arg3: memref<1x128xf32, #tpu.memory_space<vmem>>, %arg4: memref<128x128xbf16, #tpu.memory_space<vmem>>, %arg5: memref<1x128xf32, #tpu.memory_space<vmem>>, %arg6: memref<128x10xbf16, #tpu.memory_space<vmem>>, %arg7: memref<1x10xf32, #tpu.memory_space<vmem>>, %arg8: memref<8x10xf32, #tpu.memory_space<vmem>>) attributes {dimension_semantics = [#tpu.dimension_semantics<parallel>], iteration_bounds = array<i64: 1>, scalar_prefetch = 0 : i64, scratch_operands = 0 : i64, tpu.core_type = #tpu.core_type<tc>, window_params = [{transform_indices = @transform_0, window_bounds = array<i64: 8, 32>}, {pipeline_mode = #tpu.pipeline_mode<synchronous>, transform_indices = @transform_1, window_bounds = array<i64: 32, 128>}, {pipeline_mode = #tpu.pipeline_mode<synchronous>, transform_indices = @transform_2, window_bounds = array<i64: 1, 128>}, {pipeline_mode = #tpu.pipeline_mode<synchronous>, transform_indices = @transform_3, window_bounds = array<i64: 128, 128>}, {pipeline_mode = #tpu.pipeline_mode<synchronous>, transform_indices = @transform_4, window_bounds = array<i64: 1, 128>}, {pipeline_mode = #tpu.pipeline_mode<synchronous>, transform_indices = @transform_5, window_bounds = array<i64: 128, 10>}, {pipeline_mode = #tpu.pipeline_mode<synchronous>, transform_indices = @transform_6, window_bounds = array<i64: 1, 10>}, {transform_indices = @transform_7, window_bounds = array<i64: 8, 10>}]} {
    %c0 = arith.constant 0 : index
    %c0_0 = arith.constant 0 : index
    %0 = vector.load %arg1[%c0, %c0_0] : memref<8x32xf32, #tpu.memory_space<vmem>>, vector<8x32xf32>
    %1 = arith.truncf %0 : vector<8x32xf32> to vector<8x32xbf16>
    %c0_1 = arith.constant 0 : index
    %c0_2 = arith.constant 0 : index
    %2 = vector.load %arg2[%c0_1, %c0_2] : memref<32x128xbf16, #tpu.memory_space<vmem>>, vector<32x128xbf16>
    %cst = arith.constant dense<0.000000e+00> : vector<8x128xf32>
    %3 = tpu.matmul %1, %2, %cst {dimension_numbers = #tpu.dot_dimension_numbers<[1], [0], [0], [1], [0, 0, 1, 1], [], []>} : vector<8x32xbf16>, vector<32x128xbf16>, vector<8x128xf32> -> vector<8x128xf32>
    %c0_3 = arith.constant 0 : index
    %c0_4 = arith.constant 0 : index
    %4 = vector.load %arg3[%c0_3, %c0_4] : memref<1x128xf32, #tpu.memory_space<vmem>>, vector<1x128xf32>
    %5 = vector.broadcast %4 : vector<1x128xf32> to vector<8x128xf32>
    %6 = arith.addf %3, %5 : vector<8x128xf32>
    %cst_5 = arith.constant 0.000000e+00 : f32
    %7 = vector.broadcast %cst_5 : f32 to vector<8x128xf32>
    %8 = arith.maximumf %6, %7 : vector<8x128xf32>
    %9 = arith.truncf %8 : vector<8x128xf32> to vector<8x128xbf16>
    %c0_6 = arith.constant 0 : index
    %c0_7 = arith.constant 0 : index
    %10 = vector.load %arg4[%c0_6, %c0_7] : memref<128x128xbf16, #tpu.memory_space<vmem>>, vector<128x128xbf16>
    %cst_8 = arith.constant dense<0.000000e+00> : vector<8x128xf32>
    %11 = tpu.matmul %9, %10, %cst_8 {dimension_numbers = #tpu.dot_dimension_numbers<[1], [0], [0], [1], [0, 0, 1, 1], [], []>} : vector<8x128xbf16>, vector<128x128xbf16>, vector<8x128xf32> -> vector<8x128xf32>
    %c0_9 = arith.constant 0 : index
    %c0_10 = arith.constant 0 : index
    %12 = vector.load %arg5[%c0_9, %c0_10] : memref<1x128xf32, #tpu.memory_space<vmem>>, vector<1x128xf32>
    %13 = vector.broadcast %12 : vector<1x128xf32> to vector<8x128xf32>
    %14 = arith.addf %11, %13 : vector<8x128xf32>
    %cst_11 = arith.constant 0.000000e+00 : f32
    %15 = vector.broadcast %cst_11 : f32 to vector<8x128xf32>
    %16 = arith.maximumf %14, %15 : vector<8x128xf32>
    %17 = arith.truncf %16 : vector<8x128xf32> to vector<8x128xbf16>
    %c0_12 = arith.constant 0 : index
    %c0_13 = arith.constant 0 : index
    %18 = vector.load %arg6[%c0_12, %c0_13] : memref<128x10xbf16, #tpu.memory_space<vmem>>, vector<128x10xbf16>
    %cst_14 = arith.constant dense<0.000000e+00> : vector<8x10xf32>
    %19 = tpu.matmul %17, %18, %cst_14 {dimension_numbers = #tpu.dot_dimension_numbers<[1], [0], [0], [1], [0, 0, 1, 1], [], []>} : vector<8x128xbf16>, vector<128x10xbf16>, vector<8x10xf32> -> vector<8x10xf32>
    %c0_15 = arith.constant 0 : index
    %c0_16 = arith.constant 0 : index
    %20 = vector.load %arg7[%c0_15, %c0_16] : memref<1x10xf32, #tpu.memory_space<vmem>>, vector<1x10xf32>
    %21 = vector.broadcast %20 : vector<1x10xf32> to vector<8x10xf32>
    %22 = arith.addf %19, %21 : vector<8x10xf32>
    %c0_17 = arith.constant 0 : index
    %c0_18 = arith.constant 0 : index
    %23 = vector.load %arg8[%c0_17, %c0_18] : memref<8x10xf32, #tpu.memory_space<vmem>>, vector<8x10xf32>
    tpu.vector_store %arg8[%c0_17, %c0_18], %22 {strides = array<i32>} : memref<8x10xf32, #tpu.memory_space<vmem>>, vector<8x10xf32>,
    return
  }
  func.func @transform_0(%arg0: i32) -> (i32, i32) {
    %c0_i32 = arith.constant 0 : i32
    %c0_i32_0 = arith.constant 0 : i32
    return %arg0, %c0_i32 : i32, i32
  }
  func.func @transform_1(%arg0: i32) -> (i32, i32) {
    %c0_i32 = arith.constant 0 : i32
    %c0_i32_0 = arith.constant 0 : i32
    %c0_i32_1 = arith.constant 0 : i32
    return %c0_i32, %c0_i32_0 : i32, i32
  }
  func.func @transform_2(%arg0: i32) -> (i32, i32) {
    %c0_i32 = arith.constant 0 : i32
    %c0_i32_0 = arith.constant 0 : i32
    %c0_i32_1 = arith.constant 0 : i32
    return %c0_i32, %c0_i32_0 : i32, i32
  }
  func.func @transform_3(%arg0: i32) -> (i32, i32) {
    %c0_i32 = arith.constant 0 : i32
    %c0_i32_0 = arith.constant 0 : i32
    %c0_i32_1 = arith.constant 0 : i32
    return %c0_i32, %c0_i32_0 : i32, i32
  }
  func.func @transform_4(%arg0: i32) -> (i32, i32) {
    %c0_i32 = arith.constant 0 : i32
    %c0_i32_0 = arith.constant 0 : i32
    %c0_i32_1 = arith.constant 0 : i32
    return %c0_i32, %c0_i32_0 : i32, i32
  }
  func.func @transform_5(%arg0: i32) -> (i32, i32) {
    %c0_i32 = arith.constant 0 : i32
    %c0_i32_0 = arith.constant 0 : i32
    %c0_i32_1 = arith.constant 0 : i32
    return %c0_i32, %c0_i32_0 : i32, i32
  }
  func.func @transform_6(%arg0: i32) -> (i32, i32) {
    %c0_i32 = arith.constant 0 : i32
    %c0_i32_0 = arith.constant 0 : i32
    %c0_i32_1 = arith.constant 0 : i32
    return %c0_i32, %c0_i32_0 : i32, i32
  }
  func.func @transform_7(%arg0: i32) -> (i32, i32) {
    %c0_i32 = arith.constant 0 : i32
    %c0_i32_0 = arith.constant 0 : i32
    return %arg0, %c0_i32 : i32, i32
  }
}

</mosaic_0001>

<llo_original>
// kernel: mlp_forward.1
$region0: #{mlp_forward.1}
  #allocation0 [shape = 'u32[]', space=smem, size = 0x4, offset = 0x4, fixed_abs, tag = 'smem constant byte address 0x4 - core index']
  #allocation1 [shape = 'u32[72,128]{1,0:T(1,128)}', space=vmem, size = 0x9000, scoped, tag = 'internal scratch']
  %s0 = inlined_call_operand.vmem [shape: f32[8,32], index: 0, kind: input, shape index: {}]
  %s1 = inlined_call_operand.hbm [shape: bf16[32,128], index: 1, kind: input, shape index: {}]
  %s2 = inlined_call_operand.vmem [shape: f32[1,128], index: 2, kind: input, shape index: {}]
  %s3 = inlined_call_operand.vmem [shape: bf16[128,128], index: 3, kind: input, shape index: {}]
  %s4 = inlined_call_operand.vmem [shape: f32[1,128], index: 4, kind: input, shape index: {}]
  %s5 = inlined_call_operand.vmem [shape: bf16[128,10], index: 5, kind: input, shape index: {}]
  %s6 = inlined_call_operand.vmem [shape: f32[1,10], index: 6, kind: input, shape index: {}]
  %s7 = inlined_call_operand.hbm [shape: f32[8,10], index: 7, kind: output, shape index: {}]
  %s8 = sld [smem:[#allocation0]]
  $region42: #{mlp_forward.1} parent=0
    _
  %s10 = ssub.s32 1, %s8
  %s11 = scalar_select 0, %s10, %s8
  $region1: #{mlp_forward.1} parent=0
    #allocation2 [shape = 'u8[8192]{0}', space=vmem, size = 0x2000, scoped, tag = 'input window, operand 1, single buffered']
    #allocation3 [shape = 's32[1]{0}', space=sflag, size = 0x4, scoped, tag = 'scoped memory for mlp_forward.1']
    #allocation4 [shape = 's32[1]{0}', space=sflag, size = 0x4, scoped, tag = 'scoped memory for mlp_forward.1']
    #allocation5 [shape = 'u8[4096]{0}', space=vmem, size = 0x1000, scoped, tag = 'output window, operand 0, single buffered']
    %12 = vsyncpa [#allocation3], 0
    %13 = vsyncpa [#allocation4], 0
    // Predicated region
    $region2: #{mlp_forward.1} parent=1 // pred_check
      _
    $region3: #{mlp_forward.1} parent=1 // pred_check_branch
      %15 = sbr.rel (0) target = $region5
    $region4: #{mlp_forward.1} parent=1 // pred_region
      _
    $region5: #{mlp_forward.1} parent=1 // pred_fallthru
      _
    // Predicated region
    $region6: #{mlp_forward.1} parent=1 // pred_check
      _
    $region7: #{mlp_forward.1} parent=1 // pred_check_branch
      %17 = sbr.rel (0) target = $region9
    $region8: #{mlp_forward.1} parent=1 // pred_region
      %19 = vsyncadd [#allocation3], 0
      %s20 = sshll.u32 %s1, 4
      %s21 = int_to_ptr.hbm [resolvable:$true] %s20
      %s22 = sshll.u32 [#allocation2], 4
      %s23 = int_to_ptr.vmem [resolvable:$true] %s22
      %28 = dma.hbm_to_vmem [thread:$0]  %s21, 256, %s23, [#allocation3], 64, 64, 4
    $region9: #{mlp_forward.1} parent=1 // pred_fallthru
      _
    // Predicated region
    $region10: #{mlp_forward.1} parent=1 // pred_check
      _
    $region11: #{mlp_forward.1} parent=1 // pred_check_branch
      %30 = sbr.rel (0) target = $region13
    $region12: #{mlp_forward.1} parent=1 // pred_region
      _
    $region13: #{mlp_forward.1} parent=1 // pred_fallthru
      _
    // Predicated region
    $region14: #{mlp_forward.1} parent=1 // pred_check
      _
    $region15: #{mlp_forward.1} parent=1 // pred_check_branch
      %32 = sbr.rel (0) target = $region17
    $region16: #{mlp_forward.1} parent=1 // pred_region
      _
    $region17: #{mlp_forward.1} parent=1 // pred_fallthru
      _
    // Predicated region
    $region18: #{mlp_forward.1} parent=1 // pred_check
      _
    $region19: #{mlp_forward.1} parent=1 // pred_check_branch
      %34 = sbr.rel (0) target = $region21
    $region20: #{mlp_forward.1} parent=1 // pred_region
      _
    $region21: #{mlp_forward.1} parent=1 // pred_fallthru
      _
    // Predicated region
    $region22: #{mlp_forward.1} parent=1 // pred_check
      _
    $region23: #{mlp_forward.1} parent=1 // pred_check_branch
      %36 = sbr.rel (0) target = $region25
    $region24: #{mlp_forward.1} parent=1 // pred_region
      _
    $region25: #{mlp_forward.1} parent=1 // pred_fallthru
      _
    // Predicated region
    $region26: #{mlp_forward.1} parent=1 // pred_check
      _
    $region27: #{mlp_forward.1} parent=1 // pred_check_branch
      %38 = sbr.rel (0) target = $region29
    $region28: #{mlp_forward.1} parent=1 // pred_region
      _
    $region29: #{mlp_forward.1} parent=1 // pred_fallthru
      _
    // Predicated region
    $region30: #{mlp_forward.1} parent=1 // pred_check
      _
    $region31: #{mlp_forward.1} parent=1 // pred_check_branch
      %40 = sbr.rel (0) target = $region33
    $region32: #{mlp_forward.1} parent=1 // pred_region
      %42 = dma.done [#allocation3], 256
    $region33: #{mlp_forward.1} parent=1 // pred_fallthru
      _
    %v44 = vld [vmem:[%s0] sm:$0xff]
    %v45 = vpack.c.bf16 %v44, %v44
    %v46 = vld [vmem:[#allocation2] sm:$0xf]
    %v47 = vld [vmem:[#allocation2 + $0x4] sm:$0xf]
    %v48 = vld [vmem:[#allocation2 + $0x8] sm:$0xf]
    %v49 = vld [vmem:[#allocation2 + $0xc] sm:$0xf]
    %v50 = vld [vmem:[%s2] sm:$0x1]
    %v52 = vperm.slane %v50, 0
    %v58 = vunpack.c.l.b16 %v46
    %v59 = vunpack.c.l.b16 %v47
    %v60 = vunpack.c.l.b16 %v48
    %v61 = vunpack.c.l.b16 %v49
    %v62 = vpack.c.b16 %v59, %v58
    %v63 = vpack.c.b16 %v61, %v60
    %vm66 = vcmask 261120
    %v68 = vsel %vm66, %v45, 0
    %70 = vmatpush.bf16.msra.mxu0 0
    %71 = vmatpush.bf16.msra.mxu0 0
    %72 = vmatpush.bf16.msra.mxu0 0
    %73 = vmatpush.bf16.msra.mxu0 0
    %74 = vmatpush.bf16.msra.mxu0 0
    %75 = vmatpush.bf16.msra.mxu0 0
    %76 = vmatpush.bf16.msra.mxu0 %v63
    %77 = vmatpush.bf16.msra.mxu0 %v62
    %78 = vmatmul.bf16.gmra.mxu0 %v68
    %v79 = vpop.f32.mrf.mxu0
    %v80 = vadd.f32 %v52, %v79
    %v81 = vpop.f32.mrf.mxu0
    %82 = vdwg.mxu0
    %v83 = vmax.f32 %v80, 0.0
    %v84 = vpack.c.bf16 %v83, %v83
    %v85 = vld [vmem:[%s3] sm:$0xf]
    %v86 = vld [vmem:[%s3 + $0x4] sm:$0xf]
    %v87 = vld [vmem:[%s3 + $0x8] sm:$0xf]
    %v88 = vld [vmem:[%s3 + $0xc] sm:$0xf]
    %v89 = vld [vmem:[%s3 + $0x10] sm:$0xf]
    %v90 = vld [vmem:[%s3 + $0x14] sm:$0xf]
    %v91 = vld [vmem:[%s3 + $0x18] sm:$0xf]
    %v92 = vld [vmem:[%s3 + $0x1c] sm:$0xf]
    %v93 = vld [vmem:[%s3 + $0x20] sm:$0xf]
    %v94 = vld [vmem:[%s3 + $0x24] sm:$0xf]
    %v95 = vld [vmem:[%s3 + $0x28] sm:$0xf]
    %v96 = vld [vmem:[%s3 + $0x2c] sm:$0xf]
    %v97 = vld [vmem:[%s3 + $0x30] sm:$0xf]
    %v98 = vld [vmem:[%s3 + $0x34] sm:$0xf]
    %v99 = vld [vmem:[%s3 + $0x38] sm:$0xf]
    %v100 = vld [vmem:[%s3 + $0x3c] sm:$0xf]
    %v101 = vld [vmem:[%s4] sm:$0x1]
    %v103 = vperm.slane %v101, 0
    %v121 = vunpack.c.l.b16 %v85
    %v122 = vunpack.c.l.b16 %v86
    %v123 = vunpack.c.l.b16 %v87
    %v124 = vunpack.c.l.b16 %v88
    %v125 = vunpack.c.l.b16 %v89
    %v126 = vunpack.c.l.b16 %v90
    %v127 = vunpack.c.l.b16 %v91
    %v128 = vunpack.c.l.b16 %v92
    %v129 = vunpack.c.l.b16 %v93
    %v130 = vunpack.c.l.b16 %v94
    %v131 = vunpack.c.l.b16 %v95
    %v132 = vunpack.c.l.b16 %v96
    %v133 = vunpack.c.l.b16 %v97
    %v134 = vunpack.c.l.b16 %v98
    %v135 = vunpack.c.l.b16 %v99
    %v136 = vunpack.c.l.b16 %v100
    %v137 = vpack.c.b16 %v122, %v121
    %v138 = vpack.c.b16 %v124, %v123
    %v139 = vpack.c.b16 %v126, %v125
    %v140 = vpack.c.b16 %v128, %v127
    %v141 = vpack.c.b16 %v130, %v129
    %v142 = vpack.c.b16 %v132, %v131
    %v143 = vpack.c.b16 %v134, %v133
    %v144 = vpack.c.b16 %v136, %v135
    %153 = vmatpush.bf16.msra.mxu0 %v144
    %154 = vmatpush.bf16.msra.mxu0 %v143
    %155 = vmatpush.bf16.msra.mxu0 %v142
    %156 = vmatpush.bf16.msra.mxu0 %v141
    %157 = vmatpush.bf16.msra.mxu0 %v140
    %158 = vmatpush.bf16.msra.mxu0 %v139
    %159 = vmatpush.bf16.msra.mxu0 %v138
    %160 = vmatpush.bf16.msra.mxu0 %v137
    %161 = vmatmul.bf16.gmra.mxu0 %v84
    %v162 = vpop.f32.mrf.mxu0
    %v163 = vadd.f32 %v103, %v162
    %v164 = vpop.f32.mrf.mxu0
    %165 = vdwg.mxu0
    %v166 = vmax.f32 %v163, 0.0
    %v167 = vpack.c.bf16 %v166, %v166
    %v168 = vld [vmem:[%s5] sm:$0xf]
    %v169 = vld [vmem:[%s5 + $0x4] sm:$0xf]
    %v170 = vld [vmem:[%s5 + $0x8] sm:$0xf]
    %v171 = vld [vmem:[%s5 + $0xc] sm:$0xf]
    %v172 = vld [vmem:[%s5 + $0x10] sm:$0xf]
    %v173 = vld [vmem:[%s5 + $0x14] sm:$0xf]
    %v174 = vld [vmem:[%s5 + $0x18] sm:$0xf]
    %v175 = vld [vmem:[%s5 + $0x1c] sm:$0xf]
    %v176 = vld [vmem:[%s5 + $0x20] sm:$0xf]
    %v177 = vld [vmem:[%s5 + $0x24] sm:$0xf]
    %v178 = vld [vmem:[%s5 + $0x28] sm:$0xf]
    %v179 = vld [vmem:[%s5 + $0x2c] sm:$0xf]
    %v180 = vld [vmem:[%s5 + $0x30] sm:$0xf]
    %v181 = vld [vmem:[%s5 + $0x34] sm:$0xf]
    %v182 = vld [vmem:[%s5 + $0x38] sm:$0xf]
    %v183 = vld [vmem:[%s5 + $0x3c] sm:$0xf]
    %v184 = vld [vmem:[%s6] sm:$0x1]
    %v186 = vperm.slane %v184, 0
    %v204 = vunpack.c.l.b16 %v168
    %v205 = vunpack.c.l.b16 %v169
    %v206 = vunpack.c.l.b16 %v170
    %v207 = vunpack.c.l.b16 %v171
    %v208 = vunpack.c.l.b16 %v172
    %v209 = vunpack.c.l.b16 %v173
    %v210 = vunpack.c.l.b16 %v174
    %v211 = vunpack.c.l.b16 %v175
    %v212 = vunpack.c.l.b16 %v176
    %v213 = vunpack.c.l.b16 %v177
    %v214 = vunpack.c.l.b16 %v178
    %v215 = vunpack.c.l.b16 %v179
    %v216 = vunpack.c.l.b16 %v180
    %v217 = vunpack.c.l.b16 %v181
    %v218 = vunpack.c.l.b16 %v182
    %v219 = vunpack.c.l.b16 %v183
    %v220 = vpack.c.b16 %v205, %v204
    %v221 = vpack.c.b16 %v207, %v206
    %v222 = vpack.c.b16 %v209, %v208
    %v223 = vpack.c.b16 %v211, %v210
    %v224 = vpack.c.b16 %v213, %v212
    %v225 = vpack.c.b16 %v215, %v214
    %v226 = vpack.c.b16 %v217, %v216
    %v227 = vpack.c.b16 %v219, %v218
    %236 = vmatpush.bf16.msra.mxu0 %v227
    %237 = vmatpush.bf16.msra.mxu0 %v226
    %238 = vmatpush.bf16.msra.mxu0 %v225
    %239 = vmatpush.bf16.msra.mxu0 %v224
    %240 = vmatpush.bf16.msra.mxu0 %v223
    %241 = vmatpush.bf16.msra.mxu0 %v222
    %242 = vmatpush.bf16.msra.mxu0 %v221
    %243 = vmatpush.bf16.msra.mxu0 %v220
    %244 = vmatmul.bf16.gmra.mxu0 %v167
    %v245 = vpop.f32.mrf.mxu0
    %v246 = vadd.f32 %v186, %v245
    %v247 = vpop.f32.mrf.mxu0
    %248 = vdwg.mxu0
    %vm249 = vcmask 80896
    %250 = vst.msk [vmem:[#allocation5] sm:$0xff] %vm249, %v246
    // Predicated region
    $region34: #{mlp_forward.1} parent=1 // pred_check
      _
    $region35: #{mlp_forward.1} parent=1 // pred_check_branch
      %252 = sbr.rel (0) target = $region37
    $region36: #{mlp_forward.1} parent=1 // pred_region
      %254 = vsyncadd [#allocation4], 0
      %s256 = sshll.u32 [#allocation5], 4
      %s257 = int_to_ptr.vmem [resolvable:$true] %s256
      %s258 = sshll.u32 %s7, 4
      %s259 = int_to_ptr.hbm [resolvable:$true] %s258
      %261 = dma.vmem_to_hbm [thread:$0]  %s257, 128, %s259, [#allocation4]
    $region37: #{mlp_forward.1} parent=1 // pred_fallthru
      _
    // Predicated region
    $region38: #{mlp_forward.1} parent=1 // pred_check
      _
    $region39: #{mlp_forward.1} parent=1 // pred_check_branch
      %263 = sbr.rel (0) target = $region41
    $region40: #{mlp_forward.1} parent=1 // pred_region
      %265 = dma.done [#allocation4], 128
    $region41: #{mlp_forward.1} parent=1 // pred_fallthru
      _
    %266 = vsyncpa [#allocation3], 1
    %267 = vsyncpa [#allocation4], 1

</llo_original>
